<compile_context>
chip_gen: v7x
topology: tpu7x:2x2x1
jax: 0.10.0
libtpu: 0.0.40
codegen_flags: <defaults>
</compile_context>

<pallas_src>
import functools

import numpy as np
import jax
import jax.numpy as jnp
from jax import lax
from jax.experimental import pallas as pl
from jax.experimental.pallas import tpu as pltpu


L_PE = 5                            # positional-encoding levels
ENC_DIM = 1 + 2 * L_PE              # [x, sin0..4, cos0..4] = 11 (input_t_dim)
ENC_PAD = 16                        # enc kept in a fixed 16-lane layout
ONE_LANE = ENC_DIM                  # enc lane 11 is a constant 1 (carries layer-0 bias)
OUT_PAD = 128                       # every layer output padded to 128 lanes
ONE_COL = OUT_PAD - 1               # feat lane 127 is a constant 1 (carries biases)
ROWS_W = 128                        # feat-path weight rows per layer (padded K)
ROWS_ENC = ENC_PAD                  # enc-path weight rows per layer
ROWS_PER_LAYER = ROWS_W + ROWS_ENC  # 144 rows per layer in the packed slab
TB_MAX = 256                        # batch tile (feeds v6e/v7x MXU M nicely)


def get_layer_dims(layers):
    return list(zip(layers[:-1], layers[1:]))


def _round_up(x, m):
    return ((x + m - 1) // m) * m


# ----------------------------------------------------------------------------
# Kernel
# ----------------------------------------------------------------------------
def make_transnet_kernel(n_layers, skip, min_index, max_index):
    skip = tuple(skip)
    min_index = float(min_index)
    inv_range = 1.0 / (float(max_index) - min_index)
    pi = float(np.pi)

    def kernel(idx_ref, params_ref, out_ref):
        # --- positional-encoding constants built in-kernel (no captured arrays)
        lane = lax.broadcasted_iota(jnp.int32, (1, ENC_PAD), 1)     # 0..15
        is_x = lane == 0
        is_sin = (lane >= 1) & (lane <= L_PE)
        is_cos = (lane >= 1 + L_PE) & (lane <= 2 * L_PE)
        is_one = lane == ONE_LANE

        # exponent per lane: sin lanes -> 0..4, cos lanes -> 0..4, others junk
        # (junk lanes are masked out of `enc` below, so any finite value is ok).
        e = jnp.where(is_cos, lane - (1 + L_PE), lane - 1)
        pow2 = jnp.where(e == 0, 1.0,
               jnp.where(e == 1, 2.0,
               jnp.where(e == 2, 4.0,
               jnp.where(e == 3, 8.0, 16.0)))).astype(jnp.float32)
        freq = pi * pow2                                             # (1, 16)

        # --- normalize index to [-1, 1] (scalar constants fold into the VPU ops)
        x = idx_ref[...].astype(jnp.float32)                         # (TB, 1)
        x = 2.0 * (x - min_index) * inv_range - 1.0

        spec = x * freq                                              # (TB, 16)
        # enc lanes = [x, sin0..4, cos0..4, 1, 0, 0, 0, 0]; built with iota
        # masks -> no lane concatenation / relayout, just VPU + EUP work.
        enc = (jnp.where(is_x, x, 0.0)
               + jnp.where(is_sin, jnp.sin(spec), 0.0)
               + jnp.where(is_cos, jnp.cos(spec), 0.0)
               + jnp.where(is_one, 1.0, 0.0))                        # (TB, 16)

        feat = None
        for li in range(n_layers):
            base = li * ROWS_PER_LAYER
            if li == 0:
                # layer 0 input is the positional encoding only
                w_enc = params_ref[base + ROWS_W: base + ROWS_W + ROWS_ENC, :]
                z = jnp.dot(enc, w_enc, preferred_element_type=jnp.float32)
            else:
                w_feat = params_ref[base: base + ROWS_W, :]
                z = jnp.dot(feat, w_feat, preferred_element_type=jnp.float32)
                if li in skip:
                    # skip connection == extra matmul instead of lane concat
                    w_enc = params_ref[base + ROWS_W: base + ROWS_W + ROWS_ENC, :]
                    z = z + jnp.dot(enc, w_enc, preferred_element_type=jnp.float32)
            # biases are folded into the weights via the constant-1 lanes, so
            # no explicit bias add is needed here.
            feat = jnp.maximum(z, 0.0) if li != n_layers - 1 else z

        out_ref[...] = feat.astype(out_ref.dtype)                    # lane-dense (TB, 128)

    return kernel


# ----------------------------------------------------------------------------
# Parameter packing: one (n_layers*144, 128) f32 slab
# ----------------------------------------------------------------------------
def pack_params(ws, bs, skip):
    """Pack per-layer weights/biases into one (n_layers*144, 128) f32 slab.

    Per-layer block rows:
      [0, 128)   feat-path weight padded to (128, 128); row 127 holds the bias
                 (it multiplies the constant-1 lane 127 of feat).
      [128, 144) enc-path weight, rows = [x, sin0..4, cos0..4, one, pad...];
                 row 11 (the constant-1 enc lane) holds the layer-0 bias and
                 the entry that propagates the constant 1 into feat lane 127.
    """
    n_layers = len(ws)
    skip = set(int(s) for s in skip)
    slab = np.zeros((n_layers * ROWS_PER_LAYER, OUT_PAD), np.float32)

    for li in range(n_layers):
        w = np.asarray(ws[li], np.float32)               # (k_in, k_out)
        b = np.asarray(bs[li], np.float32).reshape(-1)   # (k_out,)
        k_in, k_out = w.shape
        last = (li == n_layers - 1)
        assert k_out <= (OUT_PAD if last else ONE_COL)
        base = li * ROWS_PER_LAYER
        enc_base = base + ROWS_W

        if li == 0:
            if 0 in skip:                                # input was [enc, enc]
                assert k_in == 2 * ENC_DIM
                w_enc = w[:ENC_DIM] + w[ENC_DIM:2 * ENC_DIM]
            else:
                assert k_in == ENC_DIM
                w_enc = w
            slab[enc_base:enc_base + ENC_DIM, :k_out] = w_enc
            slab[enc_base + ONE_LANE, :k_out] = b        # bias via constant-1 enc lane
            if not last:
                slab[enc_base + ONE_LANE, ONE_COL] = 1.0  # keep feat lane 127 == 1
        else:
            k_feat = int(np.asarray(ws[li - 1]).shape[1])  # previous layer's k_out
            assert k_feat <= ONE_COL
            if li in skip:
                assert k_in == k_feat + ENC_DIM
                slab[base:base + k_feat, :k_out] = w[:k_feat]
                slab[enc_base:enc_base + ENC_DIM, :k_out] = w[k_feat:k_feat + ENC_DIM]
            else:
                assert k_in == k_feat
                slab[base:base + k_feat, :k_out] = w
            slab[base + ONE_COL, :k_out] = b             # bias via constant-1 feat lane
            if not last:
                slab[base + ONE_COL, ONE_COL] = 1.0      # keep feat lane 127 == 1

    return jnp.asarray(slab)


# ----------------------------------------------------------------------------
# Wrapper
# ----------------------------------------------------------------------------
@functools.partial(jax.jit, static_argnames=("skip", "min_index", "max_index"))
def _transnet_forward_impl(index, params, *, skip, min_index, max_index):
    n_layers = params.shape[0] // ROWS_PER_LAYER
    idx = jnp.reshape(index, (-1, 1))        # reshape fuses under jit; cast in-kernel
    n = idx.shape[0]

    n8 = _round_up(max(n, 1), 8)
    tb = n8 if n8 <= TB_MAX else TB_MAX
    n_pad = _round_up(n, tb)
    if n_pad != n:
        idx = jnp.pad(idx, ((0, n_pad - n), (0, 0)))
    grid = (n_pad // tb,)

    kernel = make_transnet_kernel(n_layers, skip, min_index, max_index)

    # Advisory cost hint so XLA does not serialize surrounding work around this
    # tiny custom call.
    k_eff = sum((ROWS_ENC if li == 0 else ROWS_W + (ROWS_ENC if li in skip else 0))
                for li in range(n_layers))
    cost = pl.CostEstimate(
        flops=2 * n_pad * OUT_PAD * k_eff,
        transcendentals=2 * n_pad * ENC_PAD,
        bytes_accessed=(idx.size * idx.dtype.itemsize
                        + params.size * params.dtype.itemsize
                        + n_pad * OUT_PAD * 4),
    )

    out = pl.pallas_call(
        kernel,
        out_shape=jax.ShapeDtypeStruct((n_pad, OUT_PAD), jnp.float32),
        grid=grid,
        in_specs=[
            pl.BlockSpec((tb, 1), lambda i: (i, 0)),              # index tile
            pl.BlockSpec(params.shape, lambda i: (0, 0)),         # full param slab
        ],
        out_specs=pl.BlockSpec((tb, OUT_PAD), lambda i: (i, 0)),  # lane-dense output
        compiler_params=pltpu.CompilerParams(
            dimension_semantics=("parallel",)),                   # 2x on v7x dual TC
        cost_estimate=cost,
    )(idx, params)

    return out[:n, :3]


def transnet_forward(index, params, *, skip, min_index, max_index):
    return _transnet_forward_impl(
        jnp.asarray(index), params,
        skip=tuple(sorted(int(s) for s in skip)),
        min_index=float(min_index), max_index=float(max_index))


# ----------------------------------------------------------------------------
# Deterministic parameter init (mirrors tensorflow_init_weights shapes/rules)
# ----------------------------------------------------------------------------
def init_params(key, layers_feat, skip):
    L = get_layer_dims(layers_feat)
    n = len(L)
    ws, bs = [], []
    for li, (k_in, k_out) in enumerate(L):
        if li == 0:
            k_in = ENC_DIM
        if li in skip:
            k_in += ENC_DIM
        if li == n - 1:
            k_out = 3
        key, sub = jax.random.split(key)
        if li == n - 1:
            # torch.nn.init.uniform_(weight, b=1e-6)  -> U[0, 1e-6]
            w = jax.random.uniform(sub, (k_in, k_out), jnp.float32, 0.0, 1e-6)
        else:
            # xavier_uniform_
            limit = float(np.sqrt(6.0 / (k_in + k_out)))
            w = jax.random.uniform(sub, (k_in, k_out), jnp.float32, -limit, limit)
        b = jnp.zeros((1, k_out), jnp.float32)
        ws.append(w)
        bs.append(b)
    return ws, bs


# ----------------------------------------------------------------------------
# Pure-JAX reference (for correctness check)
# ----------------------------------------------------------------------------
def transnet_ref(index, ws, bs, *, skip, min_index, max_index):
    x = jnp.asarray(index).reshape(-1, 1).astype(jnp.float32)
    x = 2.0 * (x - min_index) / (max_index - min_index) - 1.0
    freq = np.pi * (2.0 ** np.arange(L_PE, dtype=np.float32))
    spec = x * freq
    enc = jnp.concatenate([x, jnp.sin(spec), jnp.cos(spec)], axis=-1)
    feat = enc
    for li in range(len(ws)):
        if li in skip:
            feat = jnp.concatenate([feat, enc], axis=-1)
        feat = feat @ ws[li] + bs[li]
        if li != len(ws) - 1:
            feat = jnp.maximum(feat, 0.0)
    return feat


# ----------------------------------------------------------------------------
if __name__ == "__main__":
    # cfg['pose'] = {'layers_feat': [None, 32, 32, 32], 'skip': [1],
    #                'max_index': 8, 'device': ...}
    layers_feat = [None, 32, 32, 32]   # -> linears: (11,32), (32+11,32), (32,3)
    skip = [1]
    max_index = 8
    min_index = 0

    key = jax.random.PRNGKey(0)
    k_param, k_idx, k_idx2 = jax.random.split(key, 3)
    ws, bs = init_params(k_param, layers_feat, skip)
    params = pack_params(ws, bs, skip)

    # batch of 8 frame indices in [0, max_index]
    index = jax.random.randint(k_idx, (8,), 0, max_index + 1)

    out = transnet_forward(index, params,
                           skip=skip, min_index=min_index, max_index=max_index)
    out = jax.block_until_ready(out)
    ref = transnet_ref(index, ws, bs,
                       skip=skip, min_index=min_index, max_index=max_index)
    np.testing.assert_allclose(np.asarray(out), np.asarray(ref),
                               rtol=5e-5, atol=1e-6)

    # Second check with O(1)-magnitude last-layer weights (exercises real numerics).
    ws2 = list(ws)
    ws2[-1] = ws[-1] * 1e6
    params2 = pack_params(ws2, bs, skip)
    out2 = transnet_forward(index, params2,
                            skip=skip, min_index=min_index, max_index=max_index)
    out2 = jax.block_until_ready(out2)
    ref2 = transnet_ref(index, ws2, bs,
                        skip=skip, min_index=min_index, max_index=max_index)
    np.testing.assert_allclose(np.asarray(out2), np.asarray(ref2),
                               rtol=5e-5, atol=1e-5)

    # Larger, non-multiple-of-tile batch exercises padding + multi-block grid.
    index_big = jax.random.randint(k_idx2, (300,), 0, max_index + 1)
    out3 = transnet_forward(index_big, params2,
                            skip=skip, min_index=min_index, max_index=max_index)
    out3 = jax.block_until_ready(out3)
    ref3 = transnet_ref(index_big, ws2, bs,
                        skip=skip, min_index=min_index, max_index=max_index)
    np.testing.assert_allclose(np.asarray(out3), np.asarray(ref3),
                               rtol=5e-5, atol=1e-5)

    print("KERNEL_OK")
</pallas_src>

<mosaic_0001>
module attributes {stable_mosaic.version = 11 : i64} {
  func.func @kernel(%arg0: i32, %arg1: memref<8x1xi32, #tpu.memory_space<vmem>>, %arg2: memref<432x128xf32, #tpu.memory_space<vmem>>, %arg3: memref<8x128xf32, #tpu.memory_space<vmem>>) attributes {dimension_semantics = [#tpu.dimension_semantics<parallel>], iteration_bounds = array<i64: 1>, scalar_prefetch = 0 : i64, scratch_operands = 0 : i64, tpu.core_type = #tpu.core_type<tc>, window_params = [{transform_indices = @transform_0, window_bounds = array<i64: 8, 1>}, {pipeline_mode = #tpu.pipeline_mode<synchronous>, transform_indices = @transform_1, window_bounds = array<i64: 432, 128>}, {transform_indices = @transform_2, window_bounds = array<i64: 8, 128>}]} {
    %0 = tpu.iota {dimensions = array<i32: 1>} : vector<1x16xi32>
    %c0_i32 = arith.constant 0 : i32
    %1 = vector.broadcast %c0_i32 : i32 to vector<1x16xi32>
    %2 = arith.cmpi eq, %0, %1 : vector<1x16xi32>
    %c1_i32 = arith.constant 1 : i32
    %3 = vector.broadcast %c1_i32 : i32 to vector<1x16xi32>
    %4 = arith.cmpi sge, %0, %3 : vector<1x16xi32>
    %c5_i32 = arith.constant 5 : i32
    %5 = vector.broadcast %c5_i32 : i32 to vector<1x16xi32>
    %6 = arith.cmpi sle, %0, %5 : vector<1x16xi32>
    %7 = arith.andi %4, %6 : vector<1x16xi1>
    %c6_i32 = arith.constant 6 : i32
    %8 = vector.broadcast %c6_i32 : i32 to vector<1x16xi32>
    %9 = arith.cmpi sge, %0, %8 : vector<1x16xi32>
    %c10_i32 = arith.constant 10 : i32
    %10 = vector.broadcast %c10_i32 : i32 to vector<1x16xi32>
    %11 = arith.cmpi sle, %0, %10 : vector<1x16xi32>
    %12 = arith.andi %9, %11 : vector<1x16xi1>
    %c11_i32 = arith.constant 11 : i32
    %13 = vector.broadcast %c11_i32 : i32 to vector<1x16xi32>
    %14 = arith.cmpi eq, %0, %13 : vector<1x16xi32>
    %c6_i32_0 = arith.constant 6 : i32
    %15 = vector.broadcast %c6_i32_0 : i32 to vector<1x16xi32>
    %16 = arith.subi %0, %15 : vector<1x16xi32>
    %c1_i32_1 = arith.constant 1 : i32
    %17 = vector.broadcast %c1_i32_1 : i32 to vector<1x16xi32>
    %18 = arith.subi %0, %17 : vector<1x16xi32>
    %19 = arith.select %12, %16, %18 : vector<1x16xi1>, vector<1x16xi32>
    %c0_i32_2 = arith.constant 0 : i32
    %20 = vector.broadcast %c0_i32_2 : i32 to vector<1x16xi32>
    %21 = arith.cmpi eq, %19, %20 : vector<1x16xi32>
    %c1_i32_3 = arith.constant 1 : i32
    %22 = vector.broadcast %c1_i32_3 : i32 to vector<1x16xi32>
    %23 = arith.cmpi eq, %19, %22 : vector<1x16xi32>
    %c2_i32 = arith.constant 2 : i32
    %24 = vector.broadcast %c2_i32 : i32 to vector<1x16xi32>
    %25 = arith.cmpi eq, %19, %24 : vector<1x16xi32>
    %c3_i32 = arith.constant 3 : i32
    %26 = vector.broadcast %c3_i32 : i32 to vector<1x16xi32>
    %27 = arith.cmpi eq, %19, %26 : vector<1x16xi32>
    %cst = arith.constant 8.000000e+00 : f32
    %cst_4 = arith.constant 1.600000e+01 : f32
    %28 = vector.broadcast %cst : f32 to vector<1x16xf32>
    %29 = vector.broadcast %cst_4 : f32 to vector<1x16xf32>
    %30 = arith.select %27, %28, %29 : vector<1x16xi1>, vector<1x16xf32>
    %cst_5 = arith.constant 4.000000e+00 : f32
    %31 = vector.broadcast %cst_5 : f32 to vector<1x16xf32>
    %32 = arith.select %25, %31, %30 : vector<1x16xi1>, vector<1x16xf32>
    %cst_6 = arith.constant 2.000000e+00 : f32
    %33 = vector.broadcast %cst_6 : f32 to vector<1x16xf32>
    %34 = arith.select %23, %33, %32 : vector<1x16xi1>, vector<1x16xf32>
    %cst_7 = arith.constant 1.000000e+00 : f32
    %35 = vector.broadcast %cst_7 : f32 to vector<1x16xf32>
    %36 = arith.select %21, %35, %34 : vector<1x16xi1>, vector<1x16xf32>
    %cst_8 = arith.constant 3.14159274 : f32
    %37 = vector.broadcast %cst_8 : f32 to vector<1x16xf32>
    %38 = arith.mulf %37, %36 : vector<1x16xf32>
    %c0 = arith.constant 0 : index
    %c0_9 = arith.constant 0 : index
    %39 = vector.load %arg1[%c0, %c0_9] : memref<8x1xi32, #tpu.memory_space<vmem>>, vector<8x1xi32>
    %40 = arith.sitofp %39 : vector<8x1xi32> to vector<8x1xf32>
    %cst_10 = arith.constant 0.000000e+00 : f32
    %41 = vector.broadcast %cst_10 : f32 to vector<8x1xf32>
    %42 = arith.subf %40, %41 : vector<8x1xf32>
    %cst_11 = arith.constant 2.000000e+00 : f32
    %43 = vector.broadcast %cst_11 : f32 to vector<8x1xf32>
    %44 = arith.mulf %43, %42 : vector<8x1xf32>
    %cst_12 = arith.constant 1.250000e-01 : f32
    %45 = vector.broadcast %cst_12 : f32 to vector<8x1xf32>
    %46 = arith.mulf %44, %45 : vector<8x1xf32>
    %cst_13 = arith.constant 1.000000e+00 : f32
    %47 = vector.broadcast %cst_13 : f32 to vector<8x1xf32>
    %48 = arith.subf %46, %47 : vector<8x1xf32>
    %49 = vector.broadcast %48 : vector<8x1xf32> to vector<8x16xf32>
    %50 = vector.broadcast %38 : vector<1x16xf32> to vector<8x16xf32>
    %51 = arith.mulf %49, %50 : vector<8x16xf32>
    %cst_14 = arith.constant 0.000000e+00 : f32
    %52 = vector.shape_cast %2 : vector<1x16xi1> to vector<1x16xi1>
    %53 = vector.broadcast %52 : vector<1x16xi1> to vector<8x16xi1>
    %54 = vector.shape_cast %48 : vector<8x1xf32> to vector<8x1xf32>
    %55 = vector.broadcast %54 : vector<8x1xf32> to vector<8x16xf32>
    %56 = vector.broadcast %cst_14 : f32 to vector<8x16xf32>
    %57 = arith.select %53, %55, %56 : vector<8x16xi1>, vector<8x16xf32>
    %58 = math.sin %51 : vector<8x16xf32>
    %cst_15 = arith.constant 0.000000e+00 : f32
    %59 = vector.shape_cast %7 : vector<1x16xi1> to vector<1x16xi1>
    %60 = vector.broadcast %59 : vector<1x16xi1> to vector<8x16xi1>
    %61 = vector.broadcast %cst_15 : f32 to vector<8x16xf32>
    %62 = arith.select %60, %58, %61 : vector<8x16xi1>, vector<8x16xf32>
    %63 = arith.addf %57, %62 : vector<8x16xf32>
    %64 = math.cos %51 : vector<8x16xf32>
    %cst_16 = arith.constant 0.000000e+00 : f32
    %65 = vector.shape_cast %12 : vector<1x16xi1> to vector<1x16xi1>
    %66 = vector.broadcast %65 : vector<1x16xi1> to vector<8x16xi1>
    %67 = vector.broadcast %cst_16 : f32 to vector<8x16xf32>
    %68 = arith.select %66, %64, %67 : vector<8x16xi1>, vector<8x16xf32>
    %69 = arith.addf %63, %68 : vector<8x16xf32>
    %cst_17 = arith.constant 1.000000e+00 : f32
    %cst_18 = arith.constant 0.000000e+00 : f32
    %70 = vector.broadcast %cst_17 : f32 to vector<1x16xf32>
    %71 = vector.broadcast %cst_18 : f32 to vector<1x16xf32>
    %72 = arith.select %14, %70, %71 : vector<1x16xi1>, vector<1x16xf32>
    %73 = vector.broadcast %72 : vector<1x16xf32> to vector<8x16xf32>
    %74 = arith.addf %69, %73 : vector<8x16xf32>
    %c128 = arith.constant 128 : index
    %c0_19 = arith.constant 0 : index
    %75 = vector.load %arg2[%c128, %c0_19] : memref<432x128xf32, #tpu.memory_space<vmem>>, vector<16x128xf32>
    %cst_20 = arith.constant dense<0.000000e+00> : vector<8x128xf32>
    %76 = tpu.matmul %74, %75, %cst_20 {dimension_numbers = #tpu.dot_dimension_numbers<[1], [0], [0], [1], [0, 0, 1, 1], [], []>} : vector<8x16xf32>, vector<16x128xf32>, vector<8x128xf32> -> vector<8x128xf32>
    %cst_21 = arith.constant 0.000000e+00 : f32
    %77 = vector.broadcast %cst_21 : f32 to vector<8x128xf32>
    %78 = arith.maximumf %76, %77 : vector<8x128xf32>
    %c144 = arith.constant 144 : index
    %c0_22 = arith.constant 0 : index
    %79 = vector.load %arg2[%c144, %c0_22] : memref<432x128xf32, #tpu.memory_space<vmem>>, vector<128x128xf32>
    %cst_23 = arith.constant dense<0.000000e+00> : vector<8x128xf32>
    %80 = tpu.matmul %78, %79, %cst_23 {dimension_numbers = #tpu.dot_dimension_numbers<[1], [0], [0], [1], [0, 0, 1, 1], [], []>} : vector<8x128xf32>, vector<128x128xf32>, vector<8x128xf32> -> vector<8x128xf32>
    %c272 = arith.constant 272 : index
    %c0_24 = arith.constant 0 : index
    %81 = vector.load %arg2[%c272, %c0_24] : memref<432x128xf32, #tpu.memory_space<vmem>>, vector<16x128xf32>
    %cst_25 = arith.constant dense<0.000000e+00> : vector<8x128xf32>
    %82 = tpu.matmul %74, %81, %cst_25 {dimension_numbers = #tpu.dot_dimension_numbers<[1], [0], [0], [1], [0, 0, 1, 1], [], []>} : vector<8x16xf32>, vector<16x128xf32>, vector<8x128xf32> -> vector<8x128xf32>
    %83 = arith.addf %80, %82 : vector<8x128xf32>
    %cst_26 = arith.constant 0.000000e+00 : f32
    %84 = vector.broadcast %cst_26 : f32 to vector<8x128xf32>
    %85 = arith.maximumf %83, %84 : vector<8x128xf32>
    %c288 = arith.constant 288 : index
    %c0_27 = arith.constant 0 : index
    %86 = vector.load %arg2[%c288, %c0_27] : memref<432x128xf32, #tpu.memory_space<vmem>>, vector<128x128xf32>
    %cst_28 = arith.constant dense<0.000000e+00> : vector<8x128xf32>
    %87 = tpu.matmul %85, %86, %cst_28 {dimension_numbers = #tpu.dot_dimension_numbers<[1], [0], [0], [1], [0, 0, 1, 1], [], []>} : vector<8x128xf32>, vector<128x128xf32>, vector<8x128xf32> -> vector<8x128xf32>
    %c0_29 = arith.constant 0 : index
    %c0_30 = arith.constant 0 : index
    %88 = vector.load %arg3[%c0_29, %c0_30] : memref<8x128xf32, #tpu.memory_space<vmem>>, vector<8x128xf32>
    tpu.vector_store %arg3[%c0_29, %c0_30], %87 {strides = array<i32>} : memref<8x128xf32, #tpu.memory_space<vmem>>, vector<8x128xf32>,
    return
  }
  func.func @transform_0(%arg0: i32) -> (i32, i32) {
    %c0_i32 = arith.constant 0 : i32
    %c0_i32_0 = arith.constant 0 : i32
    return %arg0, %c0_i32 : i32, i32
  }
  func.func @transform_1(%arg0: i32) -> (i32, i32) {
    %c0_i32 = arith.constant 0 : i32
    %c0_i32_0 = arith.constant 0 : i32
    %c0_i32_1 = arith.constant 0 : i32
    return %c0_i32, %c0_i32_0 : i32, i32
  }
  func.func @transform_2(%arg0: i32) -> (i32, i32) {
    %c0_i32 = arith.constant 0 : i32
    %c0_i32_0 = arith.constant 0 : i32
    return %arg0, %c0_i32 : i32, i32
  }
}

</mosaic_0001>

<llo_original>
// kernel: _transnet_forward_impl.1
$region0: #{_transnet_forward_impl.1}
  #allocation0 [shape = 'u32[]', space=smem, size = 0x4, offset = 0x4, fixed_abs, tag = 'smem constant byte address 0x4 - core index']
  #allocation1 [shape = 'u32[144,128]{1,0:T(1,128)}', space=vmem, size = 0x12000, scoped, tag = 'internal scratch']
  %s0 = inlined_call_operand.vmem [shape: s32[8,1], index: 0, kind: input, shape index: {}]
  %s1 = inlined_call_operand.hbm [shape: f32[432,128], index: 1, kind: input, shape index: {}]
  %s2 = inlined_call_operand.vmem [shape: f32[8,128], index: 2, kind: output, shape index: {}]
  %s3 = sld [smem:[#allocation0]]
  $region22: #{_transnet_forward_impl.1} parent=0
    _
  %s5 = ssub.s32 1, %s3
  %s6 = scalar_select 0, %s5, %s3
  $region1: #{_transnet_forward_impl.1} parent=0
    #allocation2 [shape = 'u8[221184]{0}', space=vmem, size = 0x36000, scoped, tag = 'input window, operand 1, single buffered']
    #allocation3 [shape = 's32[1]{0}', space=sflag, size = 0x4, scoped, tag = 'scoped memory for _transnet_forward_impl.1']
    %7 = vsyncpa [#allocation3], 0
    // Predicated region
    $region2: #{_transnet_forward_impl.1} parent=1 // pred_check
      _
    $region3: #{_transnet_forward_impl.1} parent=1 // pred_check_branch
      %9 = sbr.rel (0) target = $region5
    $region4: #{_transnet_forward_impl.1} parent=1 // pred_region
      _
    $region5: #{_transnet_forward_impl.1} parent=1 // pred_fallthru
      _
    // Predicated region
    $region6: #{_transnet_forward_impl.1} parent=1 // pred_check
      _
    $region7: #{_transnet_forward_impl.1} parent=1 // pred_check_branch
      %11 = sbr.rel (0) target = $region9
    $region8: #{_transnet_forward_impl.1} parent=1 // pred_region
      %s13 = ssub.s32 6912, 6912
      %14 = vsyncadd [#allocation3], %s13
      %s15 = sshll.u32 [#allocation2], 4
      %s16 = int_to_ptr.vmem [resolvable:$true] %s15
      %21 = dma.hbm_to_vmem [thread:$0]  %s1, 6912, %s16, [#allocation3], 128, 128, 8
    $region9: #{_transnet_forward_impl.1} parent=1 // pred_fallthru
      _
    // Predicated region
    $region10: #{_transnet_forward_impl.1} parent=1 // pred_check
      _
    $region11: #{_transnet_forward_impl.1} parent=1 // pred_check_branch
      %23 = sbr.rel (0) target = $region13
    $region12: #{_transnet_forward_impl.1} parent=1 // pred_region
      %24 = dma.done [#allocation3], 6912
    $region13: #{_transnet_forward_impl.1} parent=1 // pred_fallthru
      _
    %v25 = vlaneseq
    %v26 = vand.u32 %v25, 127
    %vm27 = vcmp.eq.s32.totalorder %v26, 0
    %vm28 = vcmp.ge.s32.totalorder %v26, 1
    %vm29 = vcmp.le.s32.totalorder %v26, 5
    %vm30 = vmand %vm28, %vm29
    %vm31 = vcmp.ge.s32.totalorder %v26, 6
    %vm32 = vcmp.le.s32.totalorder %v26, 10
    %vm33 = vmand %vm31, %vm32
    %vm34 = vcmp.eq.s32.totalorder %v26, 11
    %v35 = vsub.s32 %v26, 6
    %v36 = vsub.s32 %v26, 1
    %v37 = vsel %vm33, %v35, %v36
    %vm38 = vcmp.eq.s32.totalorder %v37, 0
    %vm39 = vcmp.eq.s32.totalorder %v37, 1
    %vm40 = vcmp.eq.s32.totalorder %v37, 2
    %vm41 = vcmp.eq.s32.totalorder %v37, 3
    %v42 = vsel %vm41, 8.0, 16.0
    %v43 = vsel %vm40, 4.0, %v42
    %v44 = vsel %vm39, 2.0, %v43
    %v45 = vsel %vm38, 1.0, %v44
    %v46 = vmul.f32 %v45, 3.1415927
    %v47 = vld [vmem:[%s0] sm:$0xff]
    %v48 = vcvt.s32.f32 %v47
    %v49 = vmul.f32 %v48, 2.0
    %v50 = vmul.f32 %v49, 0.125
    %v51 = vsub.f32 %v50, 1.0
    %53 = vset.pattern.permute.xlu0 0
    %54 = vperm.xlu0 %53, %v51
    %v55 = vpop.permute.xlu0 %54
    %v57 = vmul.f32 %v55, %v46
    %v58 = vsel %vm27, 1, 0
    %vm59 = vcmp.eq.s32.totalorder %v58, 1
    %v60 = vsel %vm59, %v55, 0.0
    %v61 = vand.u32 2147483647, %v57
    %vm62 = vcmp.le.f32.partialorder %v61, 0.7853982
    %vm63 = vcmp.lt.s32.totalorder %v57, 0
    %v64 = vand.u32 %v57, 2139095040
    %v65 = vshrl.u32 %v64, 23
    %v66 = vsub.s32 %v65, 127
    %v67 = vand.u32 2147483647, %v57
    %v68 = vand.u32 %v67, 8388607
    %v69 = vor.u32 %v68, 8388608
    %v70 = vsub.s32 0, %v69
    %v71 = vadd.s32 %v66, 1
    %vm72 = vcmp.gt.s32.totalorder %v71, 0
    %v73 = vsel %vm72, %v71, 0
    %v74 = vshrl.u32 %v73, 5
    %v75 = vand.u32 %v73, 31
    %v76 = vsub.s32 32, %v75
    %v77 = vshrl.u32 683565275, %v76
    %v78 = vshll.u32 683565275, %v75
    %v79 = vshrl.u32 2475754826, %v76
    %v80 = vor.u32 %v78, %v79
    %v81 = vshll.u32 2475754826, %v75
    %v82 = vshrl.u32 2131351028, %v76
    %v83 = vor.u32 %v81, %v82
    %v84 = vshll.u32 2131351028, %v75
    %v85 = vshrl.u32 2102212464, %v76
    %v86 = vor.u32 %v84, %v85
    %v87 = vshll.u32 2102212464, %v75
    %v88 = vshrl.u32 920167782, %v76
    %v89 = vor.u32 %v87, %v88
    %v90 = vshll.u32 920167782, %v75
    %v91 = vshrl.u32 1326507024, %v76
    %v92 = vor.u32 %v90, %v91
    %vm93 = vcmp.lt.s32.totalorder %v74, 1
    %vm94 = vcmp.lt.s32.totalorder %v74, 2
    %vm95 = vcmp.lt.s32.totalorder %v74, 3
    %vm96 = vcmp.lt.s32.totalorder %v74, 4
    %v97 = vsel %vm93, %v77, %v80
    %v98 = vsel %vm96, %v86, 2102212464
    %v99 = vsel %vm95, %v83, %v98
    %v100 = vsel %vm94, %v97, %v99
    %v101 = vsel %vm93, %v80, %v83
    %v102 = vsel %vm96, %v89, 920167782
    %v103 = vsel %vm95, %v86, %v102
    %v104 = vsel %vm94, %v101, %v103
    %v105 = vsel %vm93, %v83, %v86
    %v106 = vsel %vm96, %v92, 1326507024
    %v107 = vsel %vm95, %v89, %v106
    %v108 = vsel %vm94, %v105, %v107
    %v109 = vshll.u32 %v69, 8
    %v110 = vmul.u32.u64.compose %v109, %v108
    %v111 = vextract.low.u32 %v110
    %v112 = vextract.high.u32 %v110
    %v113 = vmul.u32.u64.compose %v109, %v104
    %v114 = vextract.low.u32 %v113
    %v115 = vextract.high.u32 %v113
    %v116 = vmul.u32 %v109, %v100
    %v117 = vadd.s32 %v112, %v114
    %vm118 = vc.u32 %v112, %v114
    %v119 = vadd.s32 %v115, 1
    %v120 = vsel %vm118, %v119, %v115
    %v121 = vadd.s32 %v116, %v120
    %v122 = vadd.s32 %v121, 536870912
    %v123 = vshrl.u32 %v122, 30
    %v124 = vshll.u32 %v123, 30
    %v125 = vsub.s32 %v121, %v124
    %vm126 = vcmp.lt.s32.totalorder %v125, 0
    %v127 = vsub.s32 0, %v125
    %v128 = vsel %vm126, %v127, %v125
    %v129 = vclz %v128
    %v130 = vsub.s32 %v129, 2
    %vm131 = vcmp.gt.s32.totalorder 0, %v130
    %v132 = vsel %vm131, 0, %v130
    %v133 = vsub.s32 32, %v132
    %v134 = vshll.u32 %v125, %v132
    %v135 = vshrl.u32 %v117, %v133
    %v136 = vor.u32 %v134, %v135
    %v137 = vsub.s32 4294967266, %v132
    %v138 = vadd.s32 %v137, 127
    %v139 = vshll.u32 %v138, 23
    %v140 = vor.u32 4788187, %v139
    %v141 = vand.u32 2147483647, %v140
    %v143 = vcvt.s32.f32 %v136
    %v144 = vmul.f32 %v143, %v141
    %v145 = vxor.u32 %v144, 2147483648
    %v146 = vsel %vm63, %v145, %v144
    %v147 = vsub.s32 4, %v123
    %v148 = vsel %vm63, %v147, %v123
    %v149 = vsel %vm62, %v57, %v146
    %v150 = vsel %vm62, 0, %v148
    %v151 = vcosq.f32.pop %v149
    %v152 = vsinq.f32.pop %v149
    %vm153 = vweird.f32 %v57
    %v154 = vadd.s32 %v150, 3
    %v155 = vand.u32 %v154, 3
    %vm156 = vcmp.lt.s32.totalorder %v155, 2
    %vm157 = vcmp.eq.s32.totalorder %v155, 0
    %v158 = vxor.u32 %v152, 2147483648
    %v159 = vsel %vm157, %v151, %v158
    %vm160 = vcmp.eq.s32.totalorder %v155, 2
    %v161 = vxor.u32 %v151, 2147483648
    %v162 = vsel %vm160, %v161, %v152
    %v163 = vsel %vm156, %v159, %v162
    %v164 = vsel %vm153, nan, %v163
    %v165 = vsel %vm30, 1, 0
    %vm166 = vcmp.eq.s32.totalorder %v165, 1
    %v167 = vsel %vm166, %v164, 0.0
    %v168 = vadd.f32 %v60, %v167
    %v169 = vand.u32 2147483647, %v57
    %vm170 = vcmp.le.f32.partialorder %v169, 0.7853982
    %vm171 = vcmp.lt.s32.totalorder %v57, 0
    %v172 = vand.u32 %v57, 2139095040
    %v173 = vshrl.u32 %v172, 23
    %v174 = vsub.s32 %v173, 127
    %v175 = vand.u32 2147483647, %v57
    %v176 = vand.u32 %v175, 8388607
    %v177 = vor.u32 %v176, 8388608
    %v178 = vsub.s32 0, %v177
    %v179 = vadd.s32 %v174, 1
    %vm180 = vcmp.gt.s32.totalorder %v179, 0
    %v181 = vsel %vm180, %v179, 0
    %v182 = vshrl.u32 %v181, 5
    %v183 = vand.u32 %v181, 31
    %v184 = vsub.s32 32, %v183
    %v185 = vshrl.u32 683565275, %v184
    %v186 = vshll.u32 683565275, %v183
    %v187 = vshrl.u32 2475754826, %v184
    %v188 = vor.u32 %v186, %v187
    %v189 = vshll.u32 2475754826, %v183
    %v190 = vshrl.u32 2131351028, %v184
    %v191 = vor.u32 %v189, %v190
    %v192 = vshll.u32 2131351028, %v183
    %v193 = vshrl.u32 2102212464, %v184
    %v194 = vor.u32 %v192, %v193
    %v195 = vshll.u32 2102212464, %v183
    %v196 = vshrl.u32 920167782, %v184
    %v197 = vor.u32 %v195, %v196
    %v198 = vshll.u32 920167782, %v183
    %v199 = vshrl.u32 1326507024, %v184
    %v200 = vor.u32 %v198, %v199
    %vm201 = vcmp.lt.s32.totalorder %v182, 1
    %vm202 = vcmp.lt.s32.totalorder %v182, 2
    %vm203 = vcmp.lt.s32.totalorder %v182, 3
    %vm204 = vcmp.lt.s32.totalorder %v182, 4
    %v205 = vsel %vm201, %v185, %v188
    %v206 = vsel %vm204, %v194, 2102212464
    %v207 = vsel %vm203, %v191, %v206
    %v208 = vsel %vm202, %v205, %v207
    %v209 = vsel %vm201, %v188, %v191
    %v210 = vsel %vm204, %v197, 920167782
    %v211 = vsel %vm203, %v194, %v210
    %v212 = vsel %vm202, %v209, %v211
    %v213 = vsel %vm201, %v191, %v194
    %v214 = vsel %vm204, %v200, 1326507024
    %v215 = vsel %vm203, %v197, %v214
    %v216 = vsel %vm202, %v213, %v215
    %v217 = vshll.u32 %v177, 8
    %v218 = vmul.u32.u64.compose %v217, %v216
    %v219 = vextract.low.u32 %v218
    %v220 = vextract.high.u32 %v218
    %v221 = vmul.u32.u64.compose %v217, %v212
    %v222 = vextract.low.u32 %v221
    %v223 = vextract.high.u32 %v221
    %v224 = vmul.u32 %v217, %v208
    %v225 = vadd.s32 %v220, %v222
    %vm226 = vc.u32 %v220, %v222
    %v227 = vadd.s32 %v223, 1
    %v228 = vsel %vm226, %v227, %v223
    %v229 = vadd.s32 %v224, %v228
    %v230 = vadd.s32 %v229, 536870912
    %v231 = vshrl.u32 %v230, 30
    %v232 = vshll.u32 %v231, 30
    %v233 = vsub.s32 %v229, %v232
    %vm234 = vcmp.lt.s32.totalorder %v233, 0
    %v235 = vsub.s32 0, %v233
    %v236 = vsel %vm234, %v235, %v233
    %v237 = vclz %v236
    %v238 = vsub.s32 %v237, 2
    %vm239 = vcmp.gt.s32.totalorder 0, %v238
    %v240 = vsel %vm239, 0, %v238
    %v241 = vsub.s32 32, %v240
    %v242 = vshll.u32 %v233, %v240
    %v243 = vshrl.u32 %v225, %v241
    %v244 = vor.u32 %v242, %v243
    %v245 = vsub.s32 4294967266, %v240
    %v246 = vadd.s32 %v245, 127
    %v247 = vshll.u32 %v246, 23
    %v248 = vor.u32 4788187, %v247
    %v249 = vand.u32 2147483647, %v248
    %v251 = vcvt.s32.f32 %v244
    %v252 = vmul.f32 %v251, %v249
    %v253 = vxor.u32 %v252, 2147483648
    %v254 = vsel %vm171, %v253, %v252
    %v255 = vsub.s32 4, %v231
    %v256 = vsel %vm171, %v255, %v231
    %v257 = vsel %vm170, %v57, %v254
    %v258 = vsel %vm170, 0, %v256
    %v259 = vcosq.f32.pop %v257
    %v260 = vsinq.f32.pop %v257
    %vm261 = vweird.f32 %v57
    %v262 = vand.u32 %v258, 3
    %vm263 = vcmp.lt.s32.totalorder %v262, 2
    %vm264 = vcmp.eq.s32.totalorder %v262, 0
    %v265 = vxor.u32 %v260, 2147483648
    %v266 = vsel %vm264, %v259, %v265
    %vm267 = vcmp.eq.s32.totalorder %v262, 2
    %v268 = vxor.u32 %v259, 2147483648
    %v269 = vsel %vm267, %v268, %v260
    %v270 = vsel %vm263, %v266, %v269
    %v271 = vsel %vm261, nan, %v270
    %v272 = vsel %vm33, 1, 0
    %vm273 = vcmp.eq.s32.totalorder %v272, 1
    %v274 = vsel %vm273, %v271, 0.0
    %v275 = vadd.f32 %v168, %v274
    %v276 = vsel %vm34, 1.0, 0.0
    %v277 = vadd.f32 %v275, %v276
    %v278 = vld [vmem:[#allocation2 + $0x80] sm:$0xff]
    %v279 = vld [vmem:[#allocation2 + $0x88] sm:$0xff]
    %vm280 = vcmask 130048
    %v282 = vsel %vm280, %v277, 0
    %284 = vmatprep.subr.mxu0 0.0
    %285 = vmatpush1.msra.mxu0 %v278
    %286 = vmatprep.subr.mxu0 0.0
    %287 = vmatpush1.msra.mxu0 %v279
    %288 = vmatprep.subr.mxu0 0.0
    %289 = vmatpush1.msra.mxu0 0.0
    %290 = vmatprep.subr.mxu0 0.0
    %291 = vmatpush1.msra.mxu0 0.0
    %292 = vmatprep.subr.mxu0 0.0
    %293 = vmatpush1.msra.mxu0 0.0
    %294 = vmatprep.subr.mxu0 0.0
    %295 = vmatpush1.msra.mxu0 0.0
    %296 = vmatprep.subr.mxu0 0.0
    %297 = vmatpush1.msra.mxu0 0.0
    %298 = vmatprep.subr.mxu0 0.0
    %299 = vmatpush1.msra.mxu0 0.0
    %300 = vmatprep.subr.mxu0 0.0
    %301 = vmatpush1.msra.mxu0 0.0
    %302 = vmatprep.subr.mxu0 0.0
    %303 = vmatpush1.msra.mxu0 0.0
    %304 = vmatprep.subr.mxu0 0.0
    %305 = vmatpush1.msra.mxu0 0.0
    %306 = vmatprep.subr.mxu0 0.0
    %307 = vmatpush1.msra.mxu0 0.0
    %308 = vmatprep.subr.mxu0 0.0
    %309 = vmatpush1.msra.mxu0 0.0
    %310 = vmatprep.subr.mxu0 0.0
    %311 = vmatpush1.msra.mxu0 0.0
    %312 = vmatprep.subr.mxu0 0.0
    %313 = vmatpush1.msra.mxu0 0.0
    %314 = vmatprep.subr.mxu0 0.0
    %315 = vmatpush1.msra.mxu0 0.0
    %316 = vmatprep.subr.mxu0 0.0
    %317 = vmatpush1.msra.mxu0 0.0
    %318 = vmatprep.subr.mxu0 0.0
    %319 = vmatpush1.msra.mxu0 0.0
    %320 = vmatprep.subr.mxu0 0.0
    %321 = vmatpush1.msra.mxu0 0.0
    %322 = vmatprep.subr.mxu0 0.0
    %323 = vmatpush1.msra.mxu0 0.0
    %324 = vmatprep.subr.mxu0 0.0
    %325 = vmatpush1.msra.mxu0 0.0
    %326 = vmatprep.subr.mxu0 0.0
    %327 = vmatpush1.msra.mxu0 0.0
    %328 = vmatprep.subr.mxu0 0.0
    %329 = vmatpush1.msra.mxu0 0.0
    %330 = vmatprep.subr.mxu0 0.0
    %331 = vmatpush1.msra.mxu0 0.0
    %332 = vmatprep.subr.mxu0 0.0
    %333 = vmatpush1.msra.mxu0 0.0
    %334 = vmatprep.subr.mxu0 0.0
    %335 = vmatpush1.msra.mxu0 0.0
    %336 = vmatprep.subr.mxu0 0.0
    %337 = vmatpush1.msra.mxu0 0.0
    %338 = vmatprep.subr.mxu0 0.0
    %339 = vmatpush1.msra.mxu0 0.0
    %340 = vmatprep.subr.mxu0 0.0
    %341 = vmatpush1.msra.mxu0 0.0
    %342 = vmatprep.subr.mxu0 0.0
    %343 = vmatpush1.msra.mxu0 0.0
    %344 = vmatprep.subr.mxu0 0.0
    %345 = vmatpush1.msra.mxu0 0.0
    %346 = vmatprep.subr.mxu0 0.0
    %347 = vmatpush1.msra.mxu0 0.0
    %348 = vmatprep.mubr.f32.mxu0 0.0
    %349 = vmatmul.mubr.f32.gmra.mrb[0].mxu0 %v282
    %v350 = vpop.f32.mrb[0].mxu0
    %v351 = vadd.f32 0.0, %v350
    %v352 = vpop.f32.mrb[0].mxu0
    %353 = vdwg.mxu0
    %v354 = vmax.f32 %v351, 0.0
    %v355 = vld [vmem:[#allocation2 + $0x90] sm:$0xff]
    %v356 = vld [vmem:[#allocation2 + $0x98] sm:$0xff]
    %v357 = vld [vmem:[#allocation2 + $0xa0] sm:$0xff]
    %v358 = vld [vmem:[#allocation2 + $0xa8] sm:$0xff]
    %v359 = vld [vmem:[#allocation2 + $0xb0] sm:$0xff]
    %v360 = vld [vmem:[#allocation2 + $0xb8] sm:$0xff]
    %v361 = vld [vmem:[#allocation2 + $0xc0] sm:$0xff]
    %v362 = vld [vmem:[#allocation2 + $0xc8] sm:$0xff]
    %v363 = vld [vmem:[#allocation2 + $0xd0] sm:$0xff]
    %v364 = vld [vmem:[#allocation2 + $0xd8] sm:$0xff]
    %v365 = vld [vmem:[#allocation2 + $0xe0] sm:$0xff]
    %v366 = vld [vmem:[#allocation2 + $0xe8] sm:$0xff]
    %v367 = vld [vmem:[#allocation2 + $0xf0] sm:$0xff]
    %v368 = vld [vmem:[#allocation2 + $0xf8] sm:$0xff]
    %v369 = vld [vmem:[#allocation2 + $0x100] sm:$0xff]
    %v370 = vld [vmem:[#allocation2 + $0x108] sm:$0xff]
    %v371 = vld [vmem:[#allocation2 + $0x110] sm:$0xff]
    %v372 = vld [vmem:[#allocation2 + $0x118] sm:$0xff]
    %373 = vmatprep.subr.mxu0 0.0
    %374 = vmatpush1.msra.mxu0 %v371
    %375 = vmatprep.subr.mxu0 0.0
    %376 = vmatpush1.msra.mxu0 %v372
    %377 = vmatprep.subr.mxu0 0.0
    %378 = vmatpush1.msra.mxu0 0.0
    %379 = vmatprep.subr.mxu0 0.0
    %380 = vmatpush1.msra.mxu0 0.0
    %381 = vmatprep.subr.mxu0 0.0
    %382 = vmatpush1.msra.mxu0 0.0
    %383 = vmatprep.subr.mxu0 0.0
    %384 = vmatpush1.msra.mxu0 0.0
    %385 = vmatprep.subr.mxu0 0.0
    %386 = vmatpush1.msra.mxu0 0.0
    %387 = vmatprep.subr.mxu0 0.0
    %388 = vmatpush1.msra.mxu0 0.0
    %389 = vmatprep.subr.mxu0 0.0
    %390 = vmatpush1.msra.mxu0 0.0
    %391 = vmatprep.subr.mxu0 0.0
    %392 = vmatpush1.msra.mxu0 0.0
    %393 = vmatprep.subr.mxu0 0.0
    %394 = vmatpush1.msra.mxu0 0.0
    %395 = vmatprep.subr.mxu0 0.0
    %396 = vmatpush1.msra.mxu0 0.0
    %397 = vmatprep.subr.mxu0 0.0
    %398 = vmatpush1.msra.mxu0 0.0
    %399 = vmatprep.subr.mxu0 0.0
    %400 = vmatpush1.msra.mxu0 0.0
    %401 = vmatprep.subr.mxu0 0.0
    %402 = vmatpush1.msra.mxu0 0.0
    %403 = vmatprep.subr.mxu0 0.0
    %404 = vmatpush1.msra.mxu0 0.0
    %405 = vmatprep.subr.mxu0 0.0
    %406 = vmatpush1.msra.mxu0 0.0
    %407 = vmatprep.subr.mxu0 0.0
    %408 = vmatpush1.msra.mxu0 0.0
    %409 = vmatprep.subr.mxu0 0.0
    %410 = vmatpush1.msra.mxu0 0.0
    %411 = vmatprep.subr.mxu0 0.0
    %412 = vmatpush1.msra.mxu0 0.0
    %413 = vmatprep.subr.mxu0 0.0
    %414 = vmatpush1.msra.mxu0 0.0
    %415 = vmatprep.subr.mxu0 0.0
    %416 = vmatpush1.msra.mxu0 0.0
    %417 = vmatprep.subr.mxu0 0.0
    %418 = vmatpush1.msra.mxu0 0.0
    %419 = vmatprep.subr.mxu0 0.0
    %420 = vmatpush1.msra.mxu0 0.0
    %421 = vmatprep.subr.mxu0 0.0
    %422 = vmatpush1.msra.mxu0 0.0
    %423 = vmatprep.subr.mxu0 0.0
    %424 = vmatpush1.msra.mxu0 0.0
    %425 = vmatprep.subr.mxu0 0.0
    %426 = vmatpush1.msra.mxu0 0.0
    %427 = vmatprep.subr.mxu0 0.0
    %428 = vmatpush1.msra.mxu0 0.0
    %429 = vmatprep.subr.mxu0 0.0
    %430 = vmatpush1.msra.mxu0 0.0
    %431 = vmatprep.subr.mxu0 0.0
    %432 = vmatpush1.msra.mxu0 0.0
    %433 = vmatprep.subr.mxu0 0.0
    %434 = vmatpush1.msra.mxu0 0.0
    %435 = vmatprep.subr.mxu0 0.0
    %436 = vmatpush1.msra.mxu0 0.0
    %437 = vmatprep.mubr.f32.mxu0 0.0
    %438 = vmatmul.mubr.f32.gmra.mrb[0].mxu0 %v282
    %v439 = vpop.f32.mrb[0].mxu0
    %v440 = vadd.f32 0.0, %v439
    %v441 = vpop.f32.mrb[0].mxu0
    %442 = vdwg.mxu0
    %443 = vmatprep.subr.mxu0 0.0
    %444 = vmatpush1.msra.mxu0 %v355
    %445 = vmatprep.subr.mxu0 0.0
    %446 = vmatpush1.msra.mxu0 %v356
    %447 = vmatprep.subr.mxu0 0.0
    %448 = vmatpush1.msra.mxu0 %v357
    %449 = vmatprep.subr.mxu0 0.0
    %450 = vmatpush1.msra.mxu0 %v358
    %451 = vmatprep.subr.mxu0 0.0
    %452 = vmatpush1.msra.mxu0 %v359
    %453 = vmatprep.subr.mxu0 0.0
    %454 = vmatpush1.msra.mxu0 %v360
    %455 = vmatprep.subr.mxu0 0.0
    %456 = vmatpush1.msra.mxu0 %v361
    %457 = vmatprep.subr.mxu0 0.0
    %458 = vmatpush1.msra.mxu0 %v362
    %459 = vmatprep.subr.mxu0 0.0
    %460 = vmatpush1.msra.mxu0 %v363
    %461 = vmatprep.subr.mxu0 0.0
    %462 = vmatpush1.msra.mxu0 %v364
    %463 = vmatprep.subr.mxu0 0.0
    %464 = vmatpush1.msra.mxu0 %v365
    %465 = vmatprep.subr.mxu0 0.0
    %466 = vmatpush1.msra.mxu0 %v366
    %467 = vmatprep.subr.mxu0 0.0
    %468 = vmatpush1.msra.mxu0 %v367
    %469 = vmatprep.subr.mxu0 0.0
    %470 = vmatpush1.msra.mxu0 %v368
    %471 = vmatprep.subr.mxu0 0.0
    %472 = vmatpush1.msra.mxu0 %v369
    %473 = vmatprep.subr.mxu0 0.0
    %474 = vmatpush1.msra.mxu0 %v370
    %475 = vmatprep.subr.mxu0 0.0
    %476 = vmatpush1.msra.mxu0 0.0
    %477 = vmatprep.subr.mxu0 0.0
    %478 = vmatpush1.msra.mxu0 0.0
    %479 = vmatprep.subr.mxu0 0.0
    %480 = vmatpush1.msra.mxu0 0.0
    %481 = vmatprep.subr.mxu0 0.0
    %482 = vmatpush1.msra.mxu0 0.0
    %483 = vmatprep.subr.mxu0 0.0
    %484 = vmatpush1.msra.mxu0 0.0
    %485 = vmatprep.subr.mxu0 0.0
    %486 = vmatpush1.msra.mxu0 0.0
    %487 = vmatprep.subr.mxu0 0.0
    %488 = vmatpush1.msra.mxu0 0.0
    %489 = vmatprep.subr.mxu0 0.0
    %490 = vmatpush1.msra.mxu0 0.0
    %491 = vmatprep.subr.mxu0 0.0
    %492 = vmatpush1.msra.mxu0 0.0
    %493 = vmatprep.subr.mxu0 0.0
    %494 = vmatpush1.msra.mxu0 0.0
    %495 = vmatprep.subr.mxu0 0.0
    %496 = vmatpush1.msra.mxu0 0.0
    %497 = vmatprep.subr.mxu0 0.0
    %498 = vmatpush1.msra.mxu0 0.0
    %499 = vmatprep.subr.mxu0 0.0
    %500 = vmatpush1.msra.mxu0 0.0
    %501 = vmatprep.subr.mxu0 0.0
    %502 = vmatpush1.msra.mxu0 0.0
    %503 = vmatprep.subr.mxu0 0.0
    %504 = vmatpush1.msra.mxu0 0.0
    %505 = vmatprep.subr.mxu0 0.0
    %506 = vmatpush1.msra.mxu0 0.0
    %507 = vmatprep.mubr.f32.mxu0 0.0
    %508 = vmatmul.mubr.f32.gmra.mrb[0].mxu0 %v354
    %v509 = vpop.f32.mrb[0].mxu0
    %v510 = vadd.f32 %v440, %v509
    %v511 = vpop.f32.mrb[0].mxu0
    %512 = vdwg.mxu0
    %v513 = vmax.f32 %v510, 0.0
    %v514 = vld [vmem:[#allocation2 + $0x120] sm:$0xff]
    %v515 = vld [vmem:[#allocation2 + $0x128] sm:$0xff]
    %v516 = vld [vmem:[#allocation2 + $0x130] sm:$0xff]
    %v517 = vld [vmem:[#allocation2 + $0x138] sm:$0xff]
    %v518 = vld [vmem:[#allocation2 + $0x140] sm:$0xff]
    %v519 = vld [vmem:[#allocation2 + $0x148] sm:$0xff]
    %v520 = vld [vmem:[#allocation2 + $0x150] sm:$0xff]
    %v521 = vld [vmem:[#allocation2 + $0x158] sm:$0xff]
    %v522 = vld [vmem:[#allocation2 + $0x160] sm:$0xff]
    %v523 = vld [vmem:[#allocation2 + $0x168] sm:$0xff]
    %v524 = vld [vmem:[#allocation2 + $0x170] sm:$0xff]
    %v525 = vld [vmem:[#allocation2 + $0x178] sm:$0xff]
    %v526 = vld [vmem:[#allocation2 + $0x180] sm:$0xff]
    %v527 = vld [vmem:[#allocation2 + $0x188] sm:$0xff]
    %v528 = vld [vmem:[#allocation2 + $0x190] sm:$0xff]
    %v529 = vld [vmem:[#allocation2 + $0x198] sm:$0xff]
    %530 = vmatprep.subr.mxu0 0.0
    %531 = vmatpush1.msra.mxu0 %v514
    %532 = vmatprep.subr.mxu0 0.0
    %533 = vmatpush1.msra.mxu0 %v515
    %534 = vmatprep.subr.mxu0 0.0
    %535 = vmatpush1.msra.mxu0 %v516
    %536 = vmatprep.subr.mxu0 0.0
    %537 = vmatpush1.msra.mxu0 %v517
    %538 = vmatprep.subr.mxu0 0.0
    %539 = vmatpush1.msra.mxu0 %v518
    %540 = vmatprep.subr.mxu0 0.0
    %541 = vmatpush1.msra.mxu0 %v519
    %542 = vmatprep.subr.mxu0 0.0
    %543 = vmatpush1.msra.mxu0 %v520
    %544 = vmatprep.subr.mxu0 0.0
    %545 = vmatpush1.msra.mxu0 %v521
    %546 = vmatprep.subr.mxu0 0.0
    %547 = vmatpush1.msra.mxu0 %v522
    %548 = vmatprep.subr.mxu0 0.0
    %549 = vmatpush1.msra.mxu0 %v523
    %550 = vmatprep.subr.mxu0 0.0
    %551 = vmatpush1.msra.mxu0 %v524
    %552 = vmatprep.subr.mxu0 0.0
    %553 = vmatpush1.msra.mxu0 %v525
    %554 = vmatprep.subr.mxu0 0.0
    %555 = vmatpush1.msra.mxu0 %v526
    %556 = vmatprep.subr.mxu0 0.0
    %557 = vmatpush1.msra.mxu0 %v527
    %558 = vmatprep.subr.mxu0 0.0
    %559 = vmatpush1.msra.mxu0 %v528
    %560 = vmatprep.subr.mxu0 0.0
    %561 = vmatpush1.msra.mxu0 %v529
    %562 = vmatprep.subr.mxu0 0.0
    %563 = vmatpush1.msra.mxu0 0.0
    %564 = vmatprep.subr.mxu0 0.0
    %565 = vmatpush1.msra.mxu0 0.0
    %566 = vmatprep.subr.mxu0 0.0
    %567 = vmatpush1.msra.mxu0 0.0
    %568 = vmatprep.subr.mxu0 0.0
    %569 = vmatpush1.msra.mxu0 0.0
    %570 = vmatprep.subr.mxu0 0.0
    %571 = vmatpush1.msra.mxu0 0.0
    %572 = vmatprep.subr.mxu0 0.0
    %573 = vmatpush1.msra.mxu0 0.0
    %574 = vmatprep.subr.mxu0 0.0
    %575 = vmatpush1.msra.mxu0 0.0
    %576 = vmatprep.subr.mxu0 0.0
    %577 = vmatpush1.msra.mxu0 0.0
    %578 = vmatprep.subr.mxu0 0.0
    %579 = vmatpush1.msra.mxu0 0.0
    %580 = vmatprep.subr.mxu0 0.0
    %581 = vmatpush1.msra.mxu0 0.0
    %582 = vmatprep.subr.mxu0 0.0
    %583 = vmatpush1.msra.mxu0 0.0
    %584 = vmatprep.subr.mxu0 0.0
    %585 = vmatpush1.msra.mxu0 0.0
    %586 = vmatprep.subr.mxu0 0.0
    %587 = vmatpush1.msra.mxu0 0.0
    %588 = vmatprep.subr.mxu0 0.0
    %589 = vmatpush1.msra.mxu0 0.0
    %590 = vmatprep.subr.mxu0 0.0
    %591 = vmatpush1.msra.mxu0 0.0
    %592 = vmatprep.subr.mxu0 0.0
    %593 = vmatpush1.msra.mxu0 0.0
    %594 = vmatprep.mubr.f32.mxu0 0.0
    %595 = vmatmul.mubr.f32.gmra.mrb[0].mxu0 %v513
    %v596 = vpop.f32.mrb[0].mxu0
    %v597 = vadd.f32 0.0, %v596
    %v598 = vpop.f32.mrb[0].mxu0
    %599 = vdwg.mxu0
    %600 = vst [vmem:[%s2] sm:$0xff] %v597
    // Predicated region
    $region14: #{_transnet_forward_impl.1} parent=1 // pred_check
      _
    $region15: #{_transnet_forward_impl.1} parent=1 // pred_check_branch
      %602 = sbr.rel (0) target = $region17
    $region16: #{_transnet_forward_impl.1} parent=1 // pred_region
      _
    $region17: #{_transnet_forward_impl.1} parent=1 // pred_fallthru
      _
    // Predicated region
    $region18: #{_transnet_forward_impl.1} parent=1 // pred_check
      _
    $region19: #{_transnet_forward_impl.1} parent=1 // pred_check_branch
      %604 = sbr.rel (0) target = $region21
    $region20: #{_transnet_forward_impl.1} parent=1 // pred_region
      _
    $region21: #{_transnet_forward_impl.1} parent=1 // pred_fallthru
      _
    %605 = vsyncpa [#allocation3], 1

</llo_original>
